<compile_context>
chip_gen: v7x
topology: tpu7x:2x2x1
jax: 0.10.0
libtpu: 0.0.40
codegen_flags: <defaults>
</compile_context>

<pallas_src>
import functools

import jax
import jax.numpy as jnp
from jax.experimental import pallas as pl
from jax.experimental.pallas import tpu as pltpu


# ---------------------------------------------------------------------------
# helpers
# ---------------------------------------------------------------------------
def _pick_tile(dim, cap, align):
    """Largest `align`-aligned divisor of `dim` that is <= cap (full dim if small)."""
    if dim <= cap:
        return dim
    t = (cap // align) * align
    while t >= align:
        if dim % t == 0:
            return t
        t -= align
    # TODO(synk): no aligned divisor <= cap; fall back to full extent (a
    # cdiv-grid with a masked tail would be the proper fix).
    return dim


def _gelu_tanh(x):
    c = 0.7978845608028654  # sqrt(2/pi)
    return 0.5 * x * (1.0 + jnp.tanh(c * (x + 0.044715 * x * x * x)))


def _accurate_recip(den):
    # EUP approximate reciprocal + one Newton-Raphson step (cheap VALU ops)
    # -> essentially f32-exact, without a VALU divide sequence.
    inv = pl.reciprocal(den, approx=True)
    return inv * (2.0 - den * inv)


# ---------------------------------------------------------------------------
# Generic tiled GEMM with fused LayerNorm prologue and bias/GELU/residual
# epilogue.  Grid = (M/tm, N/tn, K/tk) with K last ("arbitrary").
# ---------------------------------------------------------------------------
def _linear_kernel(x_ref, w_ref, b_ref, *rest, act, fuse_ln, has_res, ln_eps,
                   mxu_dtype):
    idx = 0
    if fuse_ln:
        g_ref, be_ref = rest[0], rest[1]
        idx = 2
    if has_res:
        r_ref = rest[idx]
        idx += 1
    o_ref, acc_ref = rest[idx], rest[idx + 1]

    kk = pl.program_id(2)

    @pl.when(kk == 0)
    def _():
        acc_ref[...] = jnp.zeros_like(acc_ref)

    x = x_ref[...].astype(jnp.float32)
    if fuse_ln:
        # LayerNorm prologue (requires tk == K so the whole row is visible).
        mu = jnp.mean(x, axis=-1, keepdims=True)
        xc = x - mu
        var = jnp.mean(xc * xc, axis=-1, keepdims=True)
        x = xc * jax.lax.rsqrt(var + ln_eps) * g_ref[...] + be_ref[...]

    acc_ref[...] += jnp.dot(x.astype(mxu_dtype), w_ref[...].astype(mxu_dtype),
                            preferred_element_type=jnp.float32)

    @pl.when(kk == pl.num_programs(2) - 1)
    def _():
        y = acc_ref[...] + b_ref[...]
        if act == "gelu":
            y = _gelu_tanh(y)
        if has_res:
            y = y + r_ref[...].astype(jnp.float32)
        o_ref[...] = y.astype(o_ref.dtype)


def linear(x2d, w, b, *, act=None, residual=None, ln_gamma=None, ln_beta=None,
           ln_eps=1e-5, mxu_dtype=jnp.float32,
           tm_cap=512, tn_cap=512, tk_cap=512):
    M, K = x2d.shape
    K2, N = w.shape
    assert K == K2
    fuse_ln = ln_gamma is not None
    has_res = residual is not None

    tm = _pick_tile(M, tm_cap, 8)
    tn = _pick_tile(N, tn_cap, 128)
    tk = K if fuse_ln else _pick_tile(K, tk_cap, 128)   # LN needs the full row

    b2 = b.reshape(1, N).astype(jnp.float32)

    grid = (M // tm, N // tn, K // tk)
    in_specs = [pl.BlockSpec((tm, tk), lambda i, j, kk: (i, kk)),
                pl.BlockSpec((tk, tn), lambda i, j, kk: (kk, j)),
                pl.BlockSpec((1, tn), lambda i, j, kk: (0, j))]
    inputs = [x2d, w, b2]
    if fuse_ln:
        ln_spec = pl.BlockSpec((1, tk), lambda i, j, kk: (0, kk))
        in_specs += [ln_spec, ln_spec]
        inputs += [ln_gamma.reshape(1, K).astype(jnp.float32),
                   ln_beta.reshape(1, K).astype(jnp.float32)]
    if has_res:
        in_specs += [pl.BlockSpec((tm, tn), lambda i, j, kk: (i, j))]
        inputs += [residual]

    kernel = functools.partial(_linear_kernel, act=act, fuse_ln=fuse_ln,
                               has_res=has_res, ln_eps=ln_eps,
                               mxu_dtype=mxu_dtype)
    return pl.pallas_call(
        kernel,
        out_shape=jax.ShapeDtypeStruct((M, N), x2d.dtype),
        grid=grid,
        in_specs=in_specs,
        out_specs=pl.BlockSpec((tm, tn), lambda i, j, kk: (i, j)),
        scratch_shapes=[pltpu.VMEM((tm, tn), jnp.float32)],
        compiler_params=pltpu.CompilerParams(
            dimension_semantics=("parallel", "parallel", "arbitrary")),
    )(*inputs)


# ---------------------------------------------------------------------------
# Attention: one batch element per grid step; all heads handled inside the
# kernel from the packed (N, 3C) qkv tile; output written head-merged (N, C)
# so no XLA transposes are needed before or after.
# ---------------------------------------------------------------------------
def _attn_head(qkv_ref, h, C, hd, scale, mxu_dtype):
    q = qkv_ref[0, :, h * hd:(h + 1) * hd].astype(mxu_dtype)
    k = qkv_ref[0, :, C + h * hd:C + (h + 1) * hd].astype(mxu_dtype)
    v = qkv_ref[0, :, 2 * C + h * hd:2 * C + (h + 1) * hd].astype(mxu_dtype)
    s = jax.lax.dot_general(q, k, (((1,), (1,)), ((), ())),
                            preferred_element_type=jnp.float32) * scale
    return s, v


def _attn_kernel(qkv_ref, o_ref, *, scale, num_heads, head_dim, mxu_dtype):
    C = num_heads * head_dim
    outs = []
    for h in range(num_heads):
        s, v = _attn_head(qkv_ref, h, C, head_dim, scale, mxu_dtype)
        m = jnp.max(s, axis=-1, keepdims=True)
        e = jnp.exp(s - m)
        den = jnp.sum(e, axis=-1, keepdims=True)
        p = e * _accurate_recip(den)
        outs.append(jnp.dot(p.astype(mxu_dtype), v,
                            preferred_element_type=jnp.float32))
    o_ref[0] = jnp.concatenate(outs, axis=-1).astype(o_ref.dtype)


def _attn_policy_kernel(qkv_ref, pol_ref, o_ref, *, scale, num_heads, head_dim,
                        mxu_dtype, eps):
    C = num_heads * head_dim
    n = o_ref.shape[1]
    pol = pol_ref[0].astype(jnp.float32)                     # (1, N)
    rows = jax.lax.broadcasted_iota(jnp.int32, (n, n), 0)
    cols = jax.lax.broadcasted_iota(jnp.int32, (n, n), 1)
    # attn_policy = pol + (1 - pol) * eye  ==  diag -> 1, off-diag -> pol_j
    attn_policy = jnp.where(rows == cols, 1.0, pol)          # (N, N)
    outs = []
    for h in range(num_heads):
        s, v = _attn_head(qkv_ref, h, C, head_dim, scale, mxu_dtype)
        m = jnp.max(s, axis=-1, keepdims=True)               # max over UNmasked scores
        e = jnp.exp(s - m) * attn_policy
        den = jnp.sum(e, axis=-1, keepdims=True) + eps
        p = (e + eps / n) * _accurate_recip(den)
        outs.append(jnp.dot(p.astype(mxu_dtype), v,
                            preferred_element_type=jnp.float32))
    o_ref[0] = jnp.concatenate(outs, axis=-1).astype(o_ref.dtype)


def attention(qkv3d, policy3d, *, scale, num_heads, head_dim,
              mxu_dtype=jnp.float32, eps=1e-6):
    # qkv3d: (B, N, 3C) packed [q | k | v], head-major within each third.
    B, N, threeC = qkv3d.shape
    C = num_heads * head_dim
    qkv_spec = pl.BlockSpec((1, N, threeC), lambda b: (b, 0, 0))
    o_spec = pl.BlockSpec((1, N, C), lambda b: (b, 0, 0))
    cp = pltpu.CompilerParams(dimension_semantics=("parallel",))

    if policy3d is None:
        return pl.pallas_call(
            functools.partial(_attn_kernel, scale=scale, num_heads=num_heads,
                              head_dim=head_dim, mxu_dtype=mxu_dtype),
            out_shape=jax.ShapeDtypeStruct((B, N, C), qkv3d.dtype),
            grid=(B,),
            in_specs=[qkv_spec],
            out_specs=o_spec,
            compiler_params=cp,
        )(qkv3d)

    pol_spec = pl.BlockSpec((1, 1, N), lambda b: (b, 0, 0))
    return pl.pallas_call(
        functools.partial(_attn_policy_kernel, scale=scale, num_heads=num_heads,
                          head_dim=head_dim, mxu_dtype=mxu_dtype, eps=eps),
        out_shape=jax.ShapeDtypeStruct((B, N, C), qkv3d.dtype),
        grid=(B,),
        in_specs=[qkv_spec, pol_spec],
        out_specs=o_spec,
        compiler_params=cp,
    )(qkv3d, policy3d)


# ---------------------------------------------------------------------------
# BlockT forward
# ---------------------------------------------------------------------------
def block_t_forward(x, params, policy=None, *, num_heads,
                    mxu_dtype=jnp.float32):
    B, N, C = x.shape
    H = num_heads
    hd = C // H
    scale = hd ** (-0.5)
    x2d = x.reshape(B * N, C)

    # --- attention branch: x + proj(attn(norm1(x))) --------------------------
    # ln1 fused into the qkv GEMM prologue; no head-split transposes.
    qkv = linear(x2d, params["qkv_w"], params["qkv_b"],
                 ln_gamma=params["ln1_gamma"], ln_beta=params["ln1_beta"],
                 mxu_dtype=mxu_dtype)                               # (B*N, 3C)
    qkv3d = qkv.reshape(B, N, 3 * C)                                 # free reshape
    pol3d = None if policy is None else policy.reshape(B, 1, N).astype(jnp.float32)
    o = attention(qkv3d, pol3d, scale=scale, num_heads=H, head_dim=hd,
                  mxu_dtype=mxu_dtype)                               # (B, N, C)
    x2d = linear(o.reshape(B * N, C), params["proj_w"], params["proj_b"],
                 residual=x2d, mxu_dtype=mxu_dtype)                  # fused +res

    # --- MLP branch: x + fc2(gelu(fc1(norm2(x)))) -----------------------------
    h2 = linear(x2d, params["fc1_w"], params["fc1_b"], act="gelu",
                ln_gamma=params["ln2_gamma"], ln_beta=params["ln2_beta"],
                mxu_dtype=mxu_dtype)
    x2d = linear(h2, params["fc2_w"], params["fc2_b"], residual=x2d,
                 mxu_dtype=mxu_dtype)                                # fused +res

    return x2d.reshape(B, N, C)


# ---------------------------------------------------------------------------
# pure-JAX reference (same math, same GELU approximation)
# ---------------------------------------------------------------------------
def _ref_block_t(x, p, policy, num_heads, eps_ln=1e-5, eps_attn=1e-6):
    B, N, C = x.shape
    H = num_heads
    hd = C // H

    def ln(z, g, b):
        mu = jnp.mean(z, -1, keepdims=True)
        var = jnp.mean((z - mu) ** 2, -1, keepdims=True)
        return (z - mu) * jax.lax.rsqrt(var + eps_ln) * g + b

    h = ln(x, p["ln1_gamma"], p["ln1_beta"])
    qkv = h @ p["qkv_w"] + p["qkv_b"]
    qkv = qkv.reshape(B, N, 3, H, hd).transpose(2, 0, 3, 1, 4)
    q, k, v = qkv[0], qkv[1], qkv[2]
    attn = jnp.einsum("bhqd,bhkd->bhqk", q, k) * (hd ** (-0.5))
    if policy is None:
        attn = jax.nn.softmax(attn, axis=-1)
    else:
        pol = policy.reshape(B, 1, 1, N)
        eye = jnp.eye(N, dtype=jnp.float32)[None, None]
        ap = pol + (1.0 - pol) * eye
        m = jnp.max(attn, -1, keepdims=True)
        e = jnp.exp(attn - m) * ap
        attn = (e + eps_attn / N) / (jnp.sum(e, -1, keepdims=True) + eps_attn)
    o = jnp.einsum("bhqk,bhkd->bhqd", attn, v).transpose(0, 2, 1, 3).reshape(B, N, C)
    x = x + (o @ p["proj_w"] + p["proj_b"])
    h2 = ln(x, p["ln2_gamma"], p["ln2_beta"])
    h2 = _gelu_tanh(h2 @ p["fc1_w"] + p["fc1_b"])
    x = x + (h2 @ p["fc2_w"] + p["fc2_b"])
    return x


# ---------------------------------------------------------------------------
if __name__ == "__main__":
    key = jax.random.PRNGKey(0)
    B, N_tok, C, H = 2, 8, 32, 4           # batch=2, seq=8, dim=32, heads=4
    HID = 4 * C                             # mlp_ratio=4 -> 128

    ks = jax.random.split(key, 12)

    def w_init(k, shape):
        return jax.random.normal(k, shape, jnp.float32) * (shape[0] ** -0.5)

    x = jax.random.normal(ks[0], (B, N_tok, C), jnp.float32)
    params = {
        "ln1_gamma": jnp.ones((C,), jnp.float32),
        "ln1_beta": jnp.zeros((C,), jnp.float32),
        "qkv_w": w_init(ks[1], (C, 3 * C)),
        "qkv_b": jnp.zeros((3 * C,), jnp.float32),      # qkv_bias=False default
        "proj_w": w_init(ks[2], (C, C)),
        "proj_b": 0.01 * jax.random.normal(ks[3], (C,), jnp.float32),
        "ln2_gamma": jnp.ones((C,), jnp.float32)
                     + 0.1 * jax.random.normal(ks[4], (C,), jnp.float32),
        "ln2_beta": 0.1 * jax.random.normal(ks[5], (C,), jnp.float32),
        "fc1_w": w_init(ks[6], (C, HID)),
        "fc1_b": 0.01 * jax.random.normal(ks[7], (HID,), jnp.float32),
        "fc2_w": w_init(ks[8], (HID, C)),
        "fc2_b": 0.01 * jax.random.normal(ks[9], (C,), jnp.float32),
    }

    # --- policy = None path (plain softmax), f32 MXU -------------------------
    out = jax.block_until_ready(block_t_forward(x, params, policy=None, num_heads=H))
    ref = _ref_block_t(x, params, None, H)
    assert jnp.allclose(out, ref, atol=2e-3, rtol=2e-3), "BlockT (policy=None) mismatch"

    # --- policy path (softmax_with_policy), f32 MXU ---------------------------
    policy = (jax.random.uniform(ks[10], (B, N_tok, 1)) > 0.5).astype(jnp.float32)
    out_p = jax.block_until_ready(block_t_forward(x, params, policy=policy, num_heads=H))
    ref_p = _ref_block_t(x, params, policy, H)
    assert jnp.allclose(out_p, ref_p, atol=2e-3, rtol=2e-3), "BlockT (policy) mismatch"

    # --- bf16 MXU operands (f32 accumulation) smoke test ----------------------
    out_bf = jax.block_until_ready(
        block_t_forward(x, params, policy=policy, num_heads=H,
                        mxu_dtype=jnp.bfloat16))
    assert jnp.allclose(out_bf, ref_p, atol=1e-1, rtol=1e-1), "BlockT (bf16 MXU) mismatch"

    print("KERNEL_OK")
</pallas_src>

<mosaic_0001>
module attributes {stable_mosaic.version = 11 : i64} {
  func.func @_linear_kernel(%arg0: i32, %arg1: i32, %arg2: i32, %arg3: memref<16x32xf32, #tpu.memory_space<vmem>>, %arg4: memref<32x96xf32, #tpu.memory_space<vmem>>, %arg5: memref<1x96xf32, #tpu.memory_space<vmem>>, %arg6: memref<1x32xf32, #tpu.memory_space<vmem>>, %arg7: memref<1x32xf32, #tpu.memory_space<vmem>>, %arg8: memref<16x96xf32, #tpu.memory_space<vmem>>, %arg9: memref<16x96xf32, #tpu.memory_space<vmem>>) attributes {dimension_semantics = [#tpu.dimension_semantics<parallel>, #tpu.dimension_semantics<parallel>, #tpu.dimension_semantics<arbitrary>], iteration_bounds = array<i64: 1, 1, 1>, scalar_prefetch = 0 : i64, scratch_operands = 1 : i64, tpu.core_type = #tpu.core_type<tc>, window_params = [{transform_indices = @transform_0, window_bounds = array<i64: 16, 32>}, {transform_indices = @transform_1, window_bounds = array<i64: 32, 96>}, {transform_indices = @transform_2, window_bounds = array<i64: 1, 96>}, {transform_indices = @transform_3, window_bounds = array<i64: 1, 32>}, {transform_indices = @transform_4, window_bounds = array<i64: 1, 32>}, {transform_indices = @transform_5, window_bounds = array<i64: 16, 96>}]} {
    %c0_i32 = arith.constant 0 : i32
    %0 = arith.cmpi eq, %arg2, %c0_i32 : i32
    %1 = arith.extui %0 : i1 to i32
    %c0_i32_0 = arith.constant 0 : i32
    %2 = arith.cmpi ne, %1, %c0_i32_0 : i32
    scf.if %2 {
      %cst_19 = arith.constant 0.000000e+00 : f32
      %34 = vector.broadcast %cst_19 : f32 to vector<16x96xf32>
      %c0_20 = arith.constant 0 : index
      %c0_21 = arith.constant 0 : index
      %35 = vector.load %arg9[%c0_20, %c0_21] : memref<16x96xf32, #tpu.memory_space<vmem>>, vector<16x96xf32>
      tpu.vector_store %arg9[%c0_20, %c0_21], %34 {strides = array<i32>} : memref<16x96xf32, #tpu.memory_space<vmem>>, vector<16x96xf32>,
    } else {
    }
    %c0 = arith.constant 0 : index
    %c0_1 = arith.constant 0 : index
    %3 = vector.load %arg3[%c0, %c0_1] : memref<16x32xf32, #tpu.memory_space<vmem>>, vector<16x32xf32>
    %cst = arith.constant dense<0.000000e+00> : vector<16xf32>
    %4 = vector.multi_reduction <add>, %3, %cst [1] : vector<16x32xf32> to vector<16xf32>
    %5 = vector.shape_cast %4 : vector<16xf32> to vector<16x1xf32>
    %cst_2 = arith.constant 3.200000e+01 : f32
    %6 = vector.broadcast %cst_2 : f32 to vector<16x1xf32>
    %7 = arith.divf %5, %6 : vector<16x1xf32>
    %8 = vector.broadcast %7 : vector<16x1xf32> to vector<16x32xf32>
    %9 = arith.subf %3, %8 : vector<16x32xf32>
    %10 = arith.mulf %9, %9 : vector<16x32xf32>
    %cst_3 = arith.constant dense<0.000000e+00> : vector<16xf32>
    %11 = vector.multi_reduction <add>, %10, %cst_3 [1] : vector<16x32xf32> to vector<16xf32>
    %12 = vector.shape_cast %11 : vector<16xf32> to vector<16x1xf32>
    %cst_4 = arith.constant 3.200000e+01 : f32
    %13 = vector.broadcast %cst_4 : f32 to vector<16x1xf32>
    %14 = arith.divf %12, %13 : vector<16x1xf32>
    %cst_5 = arith.constant 9.99999974E-6 : f32
    %15 = vector.broadcast %cst_5 : f32 to vector<16x1xf32>
    %16 = arith.addf %14, %15 : vector<16x1xf32>
    %17 = math.rsqrt %16 : vector<16x1xf32>
    %18 = vector.broadcast %17 : vector<16x1xf32> to vector<16x32xf32>
    %19 = arith.mulf %9, %18 : vector<16x32xf32>
    %c0_6 = arith.constant 0 : index
    %c0_7 = arith.constant 0 : index
    %20 = vector.load %arg6[%c0_6, %c0_7] : memref<1x32xf32, #tpu.memory_space<vmem>>, vector<1x32xf32>
    %21 = vector.broadcast %20 : vector<1x32xf32> to vector<16x32xf32>
    %22 = arith.mulf %19, %21 : vector<16x32xf32>
    %c0_8 = arith.constant 0 : index
    %c0_9 = arith.constant 0 : index
    %23 = vector.load %arg7[%c0_8, %c0_9] : memref<1x32xf32, #tpu.memory_space<vmem>>, vector<1x32xf32>
    %24 = vector.broadcast %23 : vector<1x32xf32> to vector<16x32xf32>
    %25 = arith.addf %22, %24 : vector<16x32xf32>
    %c0_10 = arith.constant 0 : index
    %c0_11 = arith.constant 0 : index
    %26 = vector.load %arg9[%c0_10, %c0_11] : memref<16x96xf32, #tpu.memory_space<vmem>>, vector<16x96xf32>
    %c0_12 = arith.constant 0 : index
    %c0_13 = arith.constant 0 : index
    %27 = vector.load %arg4[%c0_12, %c0_13] : memref<32x96xf32, #tpu.memory_space<vmem>>, vector<32x96xf32>
    %cst_14 = arith.constant dense<0.000000e+00> : vector<16x96xf32>
    %28 = tpu.matmul %25, %27, %cst_14 {dimension_numbers = #tpu.dot_dimension_numbers<[1], [0], [0], [1], [0, 0, 1, 1], [], []>} : vector<16x32xf32>, vector<32x96xf32>, vector<16x96xf32> -> vector<16x96xf32>
    %29 = arith.addf %26, %28 : vector<16x96xf32>
    %c0_15 = arith.constant 0 : index
    %c0_16 = arith.constant 0 : index
    %30 = vector.load %arg9[%c0_15, %c0_16] : memref<16x96xf32, #tpu.memory_space<vmem>>, vector<16x96xf32>
    tpu.vector_store %arg9[%c0_15, %c0_16], %29 {strides = array<i32>} : memref<16x96xf32, #tpu.memory_space<vmem>>, vector<16x96xf32>,
    %c0_i32_17 = arith.constant 0 : i32
    %31 = arith.cmpi eq, %arg2, %c0_i32_17 : i32
    %32 = arith.extui %31 : i1 to i32
    %c0_i32_18 = arith.constant 0 : i32
    %33 = arith.cmpi ne, %32, %c0_i32_18 : i32
    scf.if %33 {
      %c0_19 = arith.constant 0 : index
      %c0_20 = arith.constant 0 : index
      %34 = vector.load %arg9[%c0_19, %c0_20] : memref<16x96xf32, #tpu.memory_space<vmem>>, vector<16x96xf32>
      %c0_21 = arith.constant 0 : index
      %c0_22 = arith.constant 0 : index
      %35 = vector.load %arg5[%c0_21, %c0_22] : memref<1x96xf32, #tpu.memory_space<vmem>>, vector<1x96xf32>
      %36 = vector.broadcast %35 : vector<1x96xf32> to vector<16x96xf32>
      %37 = arith.addf %34, %36 : vector<16x96xf32>
      %c0_23 = arith.constant 0 : index
      %c0_24 = arith.constant 0 : index
      %38 = vector.load %arg8[%c0_23, %c0_24] : memref<16x96xf32, #tpu.memory_space<vmem>>, vector<16x96xf32>
      tpu.vector_store %arg8[%c0_23, %c0_24], %37 {strides = array<i32>} : memref<16x96xf32, #tpu.memory_space<vmem>>, vector<16x96xf32>,
    } else {
    }
    return
  }
  func.func @transform_0(%arg0: i32, %arg1: i32, %arg2: i32) -> (i32, i32) {
    %c0_i32 = arith.constant 0 : i32
    return %arg0, %arg2 : i32, i32
  }
  func.func @transform_1(%arg0: i32, %arg1: i32, %arg2: i32) -> (i32, i32) {
    %c0_i32 = arith.constant 0 : i32
    return %arg2, %arg1 : i32, i32
  }
  func.func @transform_2(%arg0: i32, %arg1: i32, %arg2: i32) -> (i32, i32) {
    %c0_i32 = arith.constant 0 : i32
    %c0_i32_0 = arith.constant 0 : i32
    return %c0_i32, %arg1 : i32, i32
  }
  func.func @transform_3(%arg0: i32, %arg1: i32, %arg2: i32) -> (i32, i32) {
    %c0_i32 = arith.constant 0 : i32
    %c0_i32_0 = arith.constant 0 : i32
    return %c0_i32, %arg2 : i32, i32
  }
  func.func @transform_4(%arg0: i32, %arg1: i32, %arg2: i32) -> (i32, i32) {
    %c0_i32 = arith.constant 0 : i32
    %c0_i32_0 = arith.constant 0 : i32
    return %c0_i32, %arg2 : i32, i32
  }
  func.func @transform_5(%arg0: i32, %arg1: i32, %arg2: i32) -> (i32, i32) {
    %c0_i32 = arith.constant 0 : i32
    return %arg0, %arg1 : i32, i32
  }
}

</mosaic_0001>

<llo_original>
// kernel: tpu_custom_call.1
$region0: #{tpu_custom_call.1}
  #allocation0 [shape = 'u32[]', space=smem, size = 0x4, offset = 0x4, fixed_abs, tag = 'smem constant byte address 0x4 - core index']
  #allocation1 [shape = 'u32[144,128]{1,0:T(1,128)}', space=vmem, size = 0x12000, scoped, tag = 'internal scratch']
  #allocation2 [shape = 'f32[16,96]{1,0:T(8,128)}', space=vmem, size = 0x2000, scoped, tag = 'scratch operand']
  %s0 = inlined_call_operand.hbm [shape: f32[16,32], index: 0, kind: input, shape index: {}]
  %s1 = inlined_call_operand.hbm [shape: f32[32,96], index: 1, kind: input, shape index: {}]
  %s2 = inlined_call_operand.vmem [shape: f32[1,96], index: 2, kind: input, shape index: {}]
  %s3 = inlined_call_operand.vmem [shape: f32[1,32], index: 3, kind: input, shape index: {}]
  %s4 = inlined_call_operand.vmem [shape: f32[1,32], index: 4, kind: input, shape index: {}]
  %s5 = inlined_call_operand.hbm [shape: f32[16,96], index: 5, kind: output, shape index: {}]
  %s6 = sld [smem:[#allocation0]]
  $region46: #{tpu_custom_call.1} parent=0
    _
  %s8 = ssub.s32 1, %s6
  %s9 = scalar_select 0, %s8, %s6
  $region1: #{tpu_custom_call.1} parent=0
    #allocation3 [shape = 'u8[8192]{0}', space=vmem, size = 0x2000, scoped, tag = 'input window, operand 0, single buffered']
    #allocation4 [shape = 's32[1]{0}', space=sflag, size = 0x4, scoped, tag = 'scoped memory for tpu_custom_call.1']
    #allocation5 [shape = 's32[1]{0}', space=sflag, size = 0x4, scoped, tag = 'scoped memory for tpu_custom_call.1']
    #allocation6 [shape = 'u8[16384]{0}', space=vmem, size = 0x4000, scoped, tag = 'input window, operand 1, single buffered']
    #allocation7 [shape = 's32[1]{0}', space=sflag, size = 0x4, scoped, tag = 'scoped memory for tpu_custom_call.1']
    #allocation8 [shape = 'u8[8192]{0}', space=vmem, size = 0x2000, scoped, tag = 'output window, operand 0, single buffered']
    %10 = vsyncpa [#allocation4], 0
    %11 = vsyncpa [#allocation7], 0
    %12 = vsyncpa [#allocation5], 0
    // Predicated region
    $region2: #{tpu_custom_call.1} parent=1 // pred_check
      _
    $region3: #{tpu_custom_call.1} parent=1 // pred_check_branch
      %14 = sbr.rel (0) target = $region5
    $region4: #{tpu_custom_call.1} parent=1 // pred_region
      %s16 = ssub.s32 256, 256
      %17 = vsyncadd [#allocation4], %s16
      %s18 = sshll.u32 [#allocation3], 4
      %s19 = int_to_ptr.vmem [resolvable:$true] %s18
      %24 = dma.hbm_to_vmem [thread:$0]  %s0, 256, %s19, [#allocation4], 128, 128, 8
    $region5: #{tpu_custom_call.1} parent=1 // pred_fallthru
      _
    // Predicated region
    $region6: #{tpu_custom_call.1} parent=1 // pred_check
      _
    $region7: #{tpu_custom_call.1} parent=1 // pred_check_branch
      %26 = sbr.rel (0) target = $region9
    $region8: #{tpu_custom_call.1} parent=1 // pred_region
      %s28 = ssub.s32 512, 512
      %29 = vsyncadd [#allocation7], %s28
      %s30 = sshll.u32 [#allocation6], 4
      %s31 = int_to_ptr.vmem [resolvable:$true] %s30
      %36 = dma.hbm_to_vmem [thread:$0]  %s1, 512, %s31, [#allocation7], 128, 128, 8
    $region9: #{tpu_custom_call.1} parent=1 // pred_fallthru
      _
    // Predicated region
    $region10: #{tpu_custom_call.1} parent=1 // pred_check
      _
    $region11: #{tpu_custom_call.1} parent=1 // pred_check_branch
      %38 = sbr.rel (0) target = $region13
    $region12: #{tpu_custom_call.1} parent=1 // pred_region
      _
    $region13: #{tpu_custom_call.1} parent=1 // pred_fallthru
      _
    // Predicated region
    $region14: #{tpu_custom_call.1} parent=1 // pred_check
      _
    $region15: #{tpu_custom_call.1} parent=1 // pred_check_branch
      %40 = sbr.rel (0) target = $region17
    $region16: #{tpu_custom_call.1} parent=1 // pred_region
      _
    $region17: #{tpu_custom_call.1} parent=1 // pred_fallthru
      _
    // Predicated region
    $region18: #{tpu_custom_call.1} parent=1 // pred_check
      _
    $region19: #{tpu_custom_call.1} parent=1 // pred_check_branch
      %42 = sbr.rel (0) target = $region21
    $region20: #{tpu_custom_call.1} parent=1 // pred_region
      _
    $region21: #{tpu_custom_call.1} parent=1 // pred_fallthru
      _
    // Predicated region
    $region22: #{tpu_custom_call.1} parent=1 // pred_check
      _
    $region23: #{tpu_custom_call.1} parent=1 // pred_check_branch
      %44 = sbr.rel (0) target = $region25
    $region24: #{tpu_custom_call.1} parent=1 // pred_region
      %45 = dma.done [#allocation4], 256
    $region25: #{tpu_custom_call.1} parent=1 // pred_fallthru
      _
    // Predicated region
    $region26: #{tpu_custom_call.1} parent=1 // pred_check
      _
    $region27: #{tpu_custom_call.1} parent=1 // pred_check_branch
      %47 = sbr.rel (0) target = $region29
    $region28: #{tpu_custom_call.1} parent=1 // pred_region
      %48 = dma.done [#allocation7], 512
    $region29: #{tpu_custom_call.1} parent=1 // pred_fallthru
      _
    %p49 = scmp.eq.s32.totalorder 0, 0
    // Predicated region
    $region30: #{tpu_custom_call.1} parent=1 // pred_check
      %p50 = pneg %p49
    $region31: #{tpu_custom_call.1} parent=1 // pred_check_branch
      %52 = sbr.rel (%p50) target = $region33
    $region32: #{tpu_custom_call.1} parent=1 // pred_region
      %vm53 = vcmask 785408
      %54 = vst.msk [vmem:[#allocation2] sm:$0xff] %vm53, 0.0
      %55 = vst.msk [vmem:[#allocation2 + $0x8] sm:$0xff] %vm53, 0.0
    $region33: #{tpu_custom_call.1} parent=1 // pred_fallthru
      _
    %v56 = vld [vmem:[#allocation3] sm:$0xff]
    %v57 = vld [vmem:[#allocation3 + $0x8] sm:$0xff]
    %vm58 = vcmask 261120
    %v59 = vsel %vm58, %v56, 0.0
    %60 = vadd.xlane.f32.xlu0 %v59
    %v61 = vpop.xlane.xlu0 %60
    %v62 = vsel %vm58, %v57, 0.0
    %63 = vadd.xlane.f32.xlu0 %v62
    %v64 = vpop.xlane.xlu0 %63
    %v65 = vrcp.pop 32.0
    %v66 = vmul.f32 %v61, %v65
    %v67 = vmul.f32 %v64, %v65
    %v68 = vsub.f32 %v56, %v66
    %v69 = vsub.f32 %v57, %v67
    %v70 = vmul.f32 %v68, %v68
    %v71 = vmul.f32 %v69, %v69
    %v72 = vsel %vm58, %v70, 0.0
    %73 = vadd.xlane.f32.xlu0 %v72
    %v74 = vpop.xlane.xlu0 %73
    %v75 = vsel %vm58, %v71, 0.0
    %76 = vadd.xlane.f32.xlu0 %v75
    %v77 = vpop.xlane.xlu0 %76
    %v78 = vmul.f32 %v74, %v65
    %v79 = vmul.f32 %v77, %v65
    %v80 = vadd.f32 %v78, 1e-05
    %v81 = vadd.f32 %v79, 1e-05
    %v82 = vrsqrt.pop %v80
    %v83 = vrsqrt.pop %v81
    %v84 = vmul.f32 %v68, %v82
    %v85 = vmul.f32 %v69, %v83
    %v86 = vld [vmem:[%s3] sm:$0x1]
    %v88 = vlaneseq
    %v89 = vshrl.u32 %v88, 7
    %v90 = vsub.s32 0, %v89
    %v91 = vrot.slane %v86, %v90
    %v93 = vmul.f32 %v84, %v91
    %v94 = vmul.f32 %v85, %v91
    %v95 = vld [vmem:[%s4] sm:$0x1]
    %v97 = vlaneseq
    %v98 = vshrl.u32 %v97, 7
    %v99 = vsub.s32 0, %v98
    %v100 = vrot.slane %v95, %v99
    %v102 = vadd.f32 %v93, %v100
    %v103 = vadd.f32 %v94, %v100
    %v104 = vld [vmem:[#allocation2] sm:$0xff]
    %v105 = vld [vmem:[#allocation2 + $0x8] sm:$0xff]
    %v106 = vld [vmem:[#allocation6] sm:$0xff]
    %v107 = vld [vmem:[#allocation6 + $0x8] sm:$0xff]
    %v108 = vld [vmem:[#allocation6 + $0x10] sm:$0xff]
    %v109 = vld [vmem:[#allocation6 + $0x18] sm:$0xff]
    %v111 = vsel %vm58, %v102, 0
    %v114 = vsel %vm58, %v103, 0
    %116 = vmatprep.subr.mxu0 0.0
    %117 = vmatpush1.msra.mxu0 %v106
    %118 = vmatprep.subr.mxu0 0.0
    %119 = vmatpush1.msra.mxu0 %v107
    %120 = vmatprep.subr.mxu0 0.0
    %121 = vmatpush1.msra.mxu0 %v108
    %122 = vmatprep.subr.mxu0 0.0
    %123 = vmatpush1.msra.mxu0 %v109
    %124 = vmatprep.subr.mxu0 0.0
    %125 = vmatpush1.msra.mxu0 0.0
    %126 = vmatprep.subr.mxu0 0.0
    %127 = vmatpush1.msra.mxu0 0.0
    %128 = vmatprep.subr.mxu0 0.0
    %129 = vmatpush1.msra.mxu0 0.0
    %130 = vmatprep.subr.mxu0 0.0
    %131 = vmatpush1.msra.mxu0 0.0
    %132 = vmatprep.subr.mxu0 0.0
    %133 = vmatpush1.msra.mxu0 0.0
    %134 = vmatprep.subr.mxu0 0.0
    %135 = vmatpush1.msra.mxu0 0.0
    %136 = vmatprep.subr.mxu0 0.0
    %137 = vmatpush1.msra.mxu0 0.0
    %138 = vmatprep.subr.mxu0 0.0
    %139 = vmatpush1.msra.mxu0 0.0
    %140 = vmatprep.subr.mxu0 0.0
    %141 = vmatpush1.msra.mxu0 0.0
    %142 = vmatprep.subr.mxu0 0.0
    %143 = vmatpush1.msra.mxu0 0.0
    %144 = vmatprep.subr.mxu0 0.0
    %145 = vmatpush1.msra.mxu0 0.0
    %146 = vmatprep.subr.mxu0 0.0
    %147 = vmatpush1.msra.mxu0 0.0
    %148 = vmatprep.subr.mxu0 0.0
    %149 = vmatpush1.msra.mxu0 0.0
    %150 = vmatprep.subr.mxu0 0.0
    %151 = vmatpush1.msra.mxu0 0.0
    %152 = vmatprep.subr.mxu0 0.0
    %153 = vmatpush1.msra.mxu0 0.0
    %154 = vmatprep.subr.mxu0 0.0
    %155 = vmatpush1.msra.mxu0 0.0
    %156 = vmatprep.subr.mxu0 0.0
    %157 = vmatpush1.msra.mxu0 0.0
    %158 = vmatprep.subr.mxu0 0.0
    %159 = vmatpush1.msra.mxu0 0.0
    %160 = vmatprep.subr.mxu0 0.0
    %161 = vmatpush1.msra.mxu0 0.0
    %162 = vmatprep.subr.mxu0 0.0
    %163 = vmatpush1.msra.mxu0 0.0
    %164 = vmatprep.subr.mxu0 0.0
    %165 = vmatpush1.msra.mxu0 0.0
    %166 = vmatprep.subr.mxu0 0.0
    %167 = vmatpush1.msra.mxu0 0.0
    %168 = vmatprep.subr.mxu0 0.0
    %169 = vmatpush1.msra.mxu0 0.0
    %170 = vmatprep.subr.mxu0 0.0
    %171 = vmatpush1.msra.mxu0 0.0
    %172 = vmatprep.subr.mxu0 0.0
    %173 = vmatpush1.msra.mxu0 0.0
    %174 = vmatprep.subr.mxu0 0.0
    %175 = vmatpush1.msra.mxu0 0.0
    %176 = vmatprep.subr.mxu0 0.0
    %177 = vmatpush1.msra.mxu0 0.0
    %178 = vmatprep.subr.mxu0 0.0
    %179 = vmatpush1.msra.mxu0 0.0
    %180 = vmatprep.mubr.f32.mxu0 0.0
    %181 = vmatmul.mubr.f32.gmra.mrb[0].mxu0 %v111
    %v182 = vpop.f32.mrb[0].mxu0
    %v183 = vadd.f32 0.0, %v182
    %v184 = vpop.f32.mrb[0].mxu0
    %185 = vmatprep.mubr.f32.mxu0 0.0
    %186 = vmatmul.mubr.f32.gmra.mrb[0].mxu0 %v114
    %v187 = vpop.f32.mrb[0].mxu0
    %v188 = vadd.f32 0.0, %v187
    %v189 = vpop.f32.mrb[0].mxu0
    %190 = vdwg.mxu0
    %v191 = vadd.f32 %v104, %v183
    %v192 = vadd.f32 %v105, %v188
    %vm193 = vcmask 785408
    %194 = vst.msk [vmem:[#allocation2] sm:$0xff] %vm193, %v191
    %195 = vst.msk [vmem:[#allocation2 + $0x8] sm:$0xff] %vm193, %v192
    // Predicated region
    $region34: #{tpu_custom_call.1} parent=1 // pred_check
      %p196 = pneg %p49
    $region35: #{tpu_custom_call.1} parent=1 // pred_check_branch
      %198 = sbr.rel (%p196) target = $region37
    $region36: #{tpu_custom_call.1} parent=1 // pred_region
      %v199 = vld [vmem:[#allocation2] sm:$0xff]
      %v200 = vld [vmem:[#allocation2 + $0x8] sm:$0xff]
      %v201 = vld [vmem:[%s2] sm:$0x1]
      %v203 = vlaneseq
      %v204 = vshrl.u32 %v203, 7
      %v205 = vsub.s32 0, %v204
      %v206 = vrot.slane %v201, %v205
      %v208 = vadd.f32 %v199, %v206
      %v209 = vadd.f32 %v200, %v206
      %210 = vst.msk [vmem:[#allocation8] sm:$0xff] %vm193, %v208
      %211 = vst.msk [vmem:[#allocation8 + $0x8] sm:$0xff] %vm193, %v209
    $region37: #{tpu_custom_call.1} parent=1 // pred_fallthru
      _
    // Predicated region
    $region38: #{tpu_custom_call.1} parent=1 // pred_check
      _
    $region39: #{tpu_custom_call.1} parent=1 // pred_check_branch
      %213 = sbr.rel (0) target = $region41
    $region40: #{tpu_custom_call.1} parent=1 // pred_region
      %s215 = ssub.s32 256, 256
      %216 = vsyncadd [#allocation5], %s215
      %s217 = sshll.u32 [#allocation8], 4
      %s218 = int_to_ptr.vmem [resolvable:$true] %s217
      %223 = dma.vmem_to_hbm [thread:$0]  %s218, 256, %s5, [#allocation5], 128, 128, 8
    $region41: #{tpu_custom_call.1} parent=1 // pred_fallthru
      _
    // Predicated region
    $region42: #{tpu_custom_call.1} parent=1 // pred_check
      _
    $region43: #{tpu_custom_call.1} parent=1 // pred_check_branch
      %225 = sbr.rel (0) target = $region45
    $region44: #{tpu_custom_call.1} parent=1 // pred_region
      %226 = dma.done [#allocation5], 256
    $region45: #{tpu_custom_call.1} parent=1 // pred_fallthru
      _
    %227 = vsyncpa [#allocation4], 1
    %228 = vsyncpa [#allocation7], 1
    %229 = vsyncpa [#allocation5], 1

</llo_original>
